<compile_context>
chip_gen: v5e
topology: v5e:2x2
jax: 0.10.0
libtpu: 0.0.40
codegen_flags: <defaults>
</compile_context>

<pallas_src>
import functools

import jax
import jax.numpy as jnp
from jax.experimental import pallas as pl
from jax.experimental.pallas import tpu as pltpu


def _round_up(x, m):
    return (x + m - 1) // m * m


# ---------------------------------------------------------------------------
# Kernels
# ---------------------------------------------------------------------------
def _expert_ffn_kernel_single(x_ref, w1_ref, b1_ref, w2_ref, b2_ref, o_ref):
    """Fast path: whole hidden dimension resident per grid step.

    Block shapes (leading size-1 expert axis indexed away):
      x_ref  : [1, tT, Dp]    w1_ref : [1, Dp, Hp]   b1_ref : [1, 1, Hp]
      w2_ref : [1, Hp, Op]    b2_ref : [1, 1, Op]    o_ref  : [1, tT, Op]
    """
    x = x_ref[0]                                   # [tT, Dp]
    w1 = w1_ref[0]                                 # [Dp, Hp]
    w2 = w2_ref[0]                                 # [Hp, Op]

    h = jnp.dot(x, w1, preferred_element_type=jnp.float32)
    h = jnp.maximum(h + b1_ref[0], 0.0)            # fc1 bias + ReLU in f32
    y = jnp.dot(h.astype(w2.dtype), w2, preferred_element_type=jnp.float32)
    o_ref[0] = (y + b2_ref[0]).astype(o_ref.dtype)


def _expert_ffn_kernel_acc(x_ref, w1_ref, b1_ref, w2_ref, b2_ref, o_ref,
                           acc_ref):
    """Chunked path: one (expert, token-tile, hidden-chunk) triple per step.

    Block shapes:
      x_ref  : [1, tT, Dp]    w1_ref : [1, Dp, tH]   b1_ref : [1, 1, tH]
      w2_ref : [1, tH, Op]    b2_ref : [1, 1, Op]
      o_ref  : [1, tT, Op]    acc_ref: [tT, Op] f32 scratch
    """
    h_idx = pl.program_id(2)

    @pl.when(h_idx == 0)
    def _init():
        acc_ref[...] = jnp.zeros_like(acc_ref)

    x = x_ref[0]          # [tT, Dp]
    w1 = w1_ref[0]        # [Dp, tH]  (pre-transposed: natural MXU layout)
    w2 = w2_ref[0]        # [tH, Op]

    # FC1 chunk + bias + ReLU (bias/relu are per-H-chunk by construction).
    h = jnp.dot(x, w1, preferred_element_type=jnp.float32)
    h = jnp.maximum(h + b1_ref[0], 0.0)

    # FC2 partial product accumulated over H chunks in f32.
    acc_ref[...] += jnp.dot(h.astype(w2.dtype), w2,
                            preferred_element_type=jnp.float32)

    @pl.when(h_idx == pl.num_programs(2) - 1)
    def _finalize():
        o_ref[0] = (acc_ref[...] + b2_ref[0]).astype(o_ref.dtype)


# ---------------------------------------------------------------------------
# Tile selection
# ---------------------------------------------------------------------------
_VMEM_BUDGET = 44 * 1024 * 1024   # headroom under the smallest per-core VMEM (v7x 64 MiB)


def _vmem_estimate(tT, tH, Dp, Op, itemsize):
    # Conservative: all tiles double-buffered + f32 accumulator.
    tile = (tT * Dp + Dp * tH + tH + tH * Op + Op + tT * Op) * itemsize
    return 2 * tile + tT * Op * 4


def _pick_tiles(T, Hp128, Dp, Op, itemsize, tile_t, tile_h):
    Tr = _round_up(max(T, 1), 8)
    if tile_t is not None:
        t_cands = [min(_round_up(tile_t, 8), Tr)]
    else:
        t_cands = sorted({Tr} | {c for c in (512, 256, 128, 64, 32, 16, 8)
                                 if c < Tr}, reverse=True)
    if tile_h is not None:
        h_cands = [min(_round_up(tile_h, 128), Hp128)]
    else:
        h_cands = sorted({Hp128} | {c for c in (1024, 512, 256, 128)
                                    if c < Hp128}, reverse=True)

    for tT in t_cands:                 # prefer big token tiles (weight reuse)
        for tH in h_cands:             # then the biggest hidden tile that fits
            if _vmem_estimate(tT, tH, Dp, Op, itemsize) <= _VMEM_BUDGET:
                return tT, tH
    return t_cands[-1], h_cands[-1]    # smallest combination; rely on limit clamp


# ---------------------------------------------------------------------------
# Wrapper
# ---------------------------------------------------------------------------
@functools.partial(jax.jit, static_argnames=("tile_t", "tile_h"))
def fused_experts_forward(x, fc1_w, fc1_b, fc2_w, fc2_b, *,
                          tile_t=None, tile_h=None):
    """x: [E,T,D]; fc1_w: [E,H,D]; fc1_b: [E,H]; fc2_w: [E,H,O]; fc2_b: [E,O]
       -> [E,T,O]"""
    E, T, D = x.shape
    H = fc1_w.shape[1]
    O = fc2_w.shape[2]
    dtype = x.dtype
    isz = jnp.dtype(dtype).itemsize

    # Pre-transpose fc1_w to [E, D, H]: one-time layout plumbing that keeps the
    # in-kernel first matmul in the MXU's natural (contract-on-sublane) layout.
    w1t = jnp.swapaxes(fc1_w, 1, 2)

    # --- tile sizes ---------------------------------------------------------
    Dp = _round_up(D, 128)
    Op = _round_up(O, 128)
    Hp128 = _round_up(H, 128)
    tT, tH = _pick_tiles(T, Hp128, Dp, Op, isz, tile_t, tile_h)

    Tp = _round_up(T, tT)
    Hp = _round_up(Hp128, tH)

    # --- zero-pad to tile multiples (sliced off at the end) -----------------
    # Zero padding is exact: padded D contributes 0 to FC1, padded H units are
    # relu(0+0)=0 and their FC2 rows are 0, padded O columns are dropped.
    x_p = jnp.pad(x, ((0, 0), (0, Tp - T), (0, Dp - D)))
    w1_p = jnp.pad(w1t, ((0, 0), (0, Dp - D), (0, Hp - H)))
    b1_p = jnp.pad(fc1_b, ((0, 0), (0, Hp - H))).reshape(E, 1, Hp)
    w2_p = jnp.pad(fc2_w, ((0, 0), (0, Hp - H), (0, Op - O)))
    b2_p = jnp.pad(fc2_b, ((0, 0), (0, Op - O))).reshape(E, 1, Op)

    n_h = Hp // tH

    # Advisory cost estimate for XLA scheduling around the custom call.
    flops = 2 * E * Tp * Dp * Hp + 2 * E * Tp * Hp * Op
    bytes_accessed = (x_p.size + w1_p.size + b1_p.size + w2_p.size
                      + b2_p.size + E * Tp * Op) * isz
    cost = pl.CostEstimate(flops=int(flops), transcendentals=0,
                           bytes_accessed=int(bytes_accessed))

    vmem_est = _vmem_estimate(tT, tH, Dp, Op, isz) + (1 << 20)
    vmem_limit = int(min(max(vmem_est, 32 * 1024 * 1024), 56 * 1024 * 1024))

    if n_h == 1:
        # ----- fast path: whole hidden dimension per step --------------------
        grid = (E, Tp // tT)
        out_p = pl.pallas_call(
            _expert_ffn_kernel_single,
            out_shape=jax.ShapeDtypeStruct((E, Tp, Op), dtype),
            grid_spec=pltpu.PrefetchScalarGridSpec(
                num_scalar_prefetch=0,
                grid=grid,
                in_specs=[
                    pl.BlockSpec((1, tT, Dp), lambda e, t: (e, t, 0)),  # x
                    pl.BlockSpec((1, Dp, Hp), lambda e, t: (e, 0, 0)),  # fc1_w^T
                    pl.BlockSpec((1, 1, Hp), lambda e, t: (e, 0, 0)),   # fc1_b
                    pl.BlockSpec((1, Hp, Op), lambda e, t: (e, 0, 0)),  # fc2_w
                    pl.BlockSpec((1, 1, Op), lambda e, t: (e, 0, 0)),   # fc2_b
                ],
                out_specs=pl.BlockSpec((1, tT, Op), lambda e, t: (e, t, 0)),
            ),
            compiler_params=pltpu.CompilerParams(
                dimension_semantics=("parallel", "parallel"),
                vmem_limit_bytes=vmem_limit,
            ),
            cost_estimate=cost,
        )(x_p, w1_p, b1_p, w2_p, b2_p)
    else:
        # ----- chunked path: accumulate FC2 over hidden chunks ---------------
        grid = (E, Tp // tT, n_h)
        out_p = pl.pallas_call(
            _expert_ffn_kernel_acc,
            out_shape=jax.ShapeDtypeStruct((E, Tp, Op), dtype),
            grid_spec=pltpu.PrefetchScalarGridSpec(
                num_scalar_prefetch=0,
                grid=grid,
                in_specs=[
                    pl.BlockSpec((1, tT, Dp), lambda e, t, h: (e, t, 0)),  # x
                    pl.BlockSpec((1, Dp, tH), lambda e, t, h: (e, 0, h)),  # fc1_w^T
                    pl.BlockSpec((1, 1, tH), lambda e, t, h: (e, 0, h)),   # fc1_b
                    pl.BlockSpec((1, tH, Op), lambda e, t, h: (e, h, 0)),  # fc2_w
                    pl.BlockSpec((1, 1, Op), lambda e, t, h: (e, 0, 0)),   # fc2_b
                ],
                out_specs=pl.BlockSpec((1, tT, Op), lambda e, t, h: (e, t, 0)),
                scratch_shapes=[pltpu.VMEM((tT, Op), jnp.float32)],
            ),
            compiler_params=pltpu.CompilerParams(
                dimension_semantics=("parallel", "parallel", "arbitrary"),
                vmem_limit_bytes=vmem_limit,
            ),
            cost_estimate=cost,
        )(x_p, w1_p, b1_p, w2_p, b2_p)

    # Strip padding. NOTE: if T is a padded expert capacity with fewer real
    # tokens, padded rows produce relu(b1)@w2 + b2 — harmless because the MoE
    # combine step zero-weights them (same behavior as the torch module).
    return out_p[:, :T, :O]


def _reference_forward(x, fc1_w, fc1_b, fc2_w, fc2_b):
    # Pure-JAX mirror of the torch dense forward.
    y = jnp.einsum("etd,ehd->eth", x, fc1_w) + fc1_b[:, None, :]
    y = jnp.maximum(y, 0.0)
    y = jnp.einsum("eth,eho->eto", y, fc2_w) + fc2_b[:, None, :]
    return y


def _make_inputs(key, E, T, D, H, O, dtype=jnp.float32):
    kx, k1w, k1b, k2w, k2b = jax.random.split(key, 5)
    x = jax.random.normal(kx, (E, T, D), dtype=dtype)
    fc1_w = jax.random.normal(k1w, (E, H, D), dtype=dtype) * 0.1
    fc1_b = jax.random.normal(k1b, (E, H), dtype=dtype) * 0.1
    fc2_w = jax.random.normal(k2w, (E, H, O), dtype=dtype) * 0.1
    fc2_b = jax.random.normal(k2b, (E, O), dtype=dtype) * 0.1
    return x, fc1_w, fc1_b, fc2_w, fc2_b


if __name__ == "__main__":
    key = jax.random.PRNGKey(0)
    k0, k1, k2 = jax.random.split(key, 3)

    # 1) Small synthetic config: 2 local experts, 8 tokens/expert, model_dim=32,
    #    hidden_size_per_expert=32, output_dim = model_dim (default).
    args = _make_inputs(k0, E=2, T=8, D=32, H=32, O=32)
    out = jax.block_until_ready(fused_experts_forward(*args))
    ref = _reference_forward(*args)
    assert out.shape == ref.shape
    assert jnp.allclose(out, ref, atol=1e-4, rtol=1e-4), "mismatch (tiny cfg)"

    # 2) Unaligned dims exercise padding (T, D, H, O not multiples of 8/128).
    args = _make_inputs(k1, E=2, T=24, D=48, H=96, O=40)
    out = jax.block_until_ready(fused_experts_forward(*args))
    ref = _reference_forward(*args)
    assert jnp.allclose(out, ref, atol=1e-4, rtol=1e-4), "mismatch (padded cfg)"

    # 3) Force the chunked-accumulator path (multiple hidden chunks).
    args = _make_inputs(k2, E=2, T=16, D=64, H=320, O=72)
    out = jax.block_until_ready(fused_experts_forward(*args, tile_h=128))
    ref = _reference_forward(*args)
    assert jnp.allclose(out, ref, atol=1e-3, rtol=1e-3), "mismatch (chunked cfg)"

    print("KERNEL_OK")
</pallas_src>

<mosaic_0001>
module attributes {stable_mosaic.version = 11 : i64} {
  func.func @_expert_ffn_kernel_single(%arg0: i32, %arg1: i32, %arg2: memref<1x8x128xf32, #tpu.memory_space<vmem>>, %arg3: memref<1x128x128xf32, #tpu.memory_space<vmem>>, %arg4: memref<1x1x128xf32, #tpu.memory_space<vmem>>, %arg5: memref<1x128x128xf32, #tpu.memory_space<vmem>>, %arg6: memref<1x1x128xf32, #tpu.memory_space<vmem>>, %arg7: memref<1x8x128xf32, #tpu.memory_space<vmem>>) attributes {dimension_semantics = [#tpu.dimension_semantics<parallel>, #tpu.dimension_semantics<parallel>], iteration_bounds = array<i64: 2, 1>, scalar_prefetch = 0 : i64, scratch_operands = 0 : i64, tpu.core_type = #tpu.core_type<tc>, window_params = [{transform_indices = @transform_0, window_bounds = array<i64: 1, 8, 128>}, {transform_indices = @transform_1, window_bounds = array<i64: 1, 128, 128>}, {transform_indices = @transform_2, window_bounds = array<i64: 1, 1, 128>}, {transform_indices = @transform_3, window_bounds = array<i64: 1, 128, 128>}, {transform_indices = @transform_4, window_bounds = array<i64: 1, 1, 128>}, {transform_indices = @transform_5, window_bounds = array<i64: 1, 8, 128>}]} {
    %c0 = arith.constant 0 : index
    %c0_0 = arith.constant 0 : index
    %c0_1 = arith.constant 0 : index
    %0 = vector.load %arg2[%c0, %c0_0, %c0_1] : memref<1x8x128xf32, #tpu.memory_space<vmem>>, vector<1x8x128xf32>
    %1 = vector.shape_cast %0 : vector<1x8x128xf32> to vector<8x128xf32>
    %c0_2 = arith.constant 0 : index
    %c0_3 = arith.constant 0 : index
    %c0_4 = arith.constant 0 : index
    %2 = vector.load %arg3[%c0_2, %c0_3, %c0_4] : memref<1x128x128xf32, #tpu.memory_space<vmem>>, vector<1x128x128xf32>
    %3 = vector.shape_cast %2 : vector<1x128x128xf32> to vector<128x128xf32>
    %c0_5 = arith.constant 0 : index
    %c0_6 = arith.constant 0 : index
    %c0_7 = arith.constant 0 : index
    %4 = vector.load %arg5[%c0_5, %c0_6, %c0_7] : memref<1x128x128xf32, #tpu.memory_space<vmem>>, vector<1x128x128xf32>
    %5 = vector.shape_cast %4 : vector<1x128x128xf32> to vector<128x128xf32>
    %cst = arith.constant dense<0.000000e+00> : vector<8x128xf32>
    %6 = tpu.matmul %1, %3, %cst {dimension_numbers = #tpu.dot_dimension_numbers<[1], [0], [0], [1], [0, 0, 1, 1], [], []>} : vector<8x128xf32>, vector<128x128xf32>, vector<8x128xf32> -> vector<8x128xf32>
    %c0_8 = arith.constant 0 : index
    %c0_9 = arith.constant 0 : index
    %c0_10 = arith.constant 0 : index
    %7 = vector.load %arg4[%c0_8, %c0_9, %c0_10] : memref<1x1x128xf32, #tpu.memory_space<vmem>>, vector<1x1x128xf32>
    %8 = vector.shape_cast %7 : vector<1x1x128xf32> to vector<1x128xf32>
    %9 = vector.broadcast %8 : vector<1x128xf32> to vector<8x128xf32>
    %10 = arith.addf %6, %9 : vector<8x128xf32>
    %cst_11 = arith.constant 0.000000e+00 : f32
    %11 = vector.broadcast %cst_11 : f32 to vector<8x128xf32>
    %12 = arith.maximumf %10, %11 : vector<8x128xf32>
    %cst_12 = arith.constant dense<0.000000e+00> : vector<8x128xf32>
    %13 = tpu.matmul %12, %5, %cst_12 {dimension_numbers = #tpu.dot_dimension_numbers<[1], [0], [0], [1], [0, 0, 1, 1], [], []>} : vector<8x128xf32>, vector<128x128xf32>, vector<8x128xf32> -> vector<8x128xf32>
    %c0_13 = arith.constant 0 : index
    %c0_14 = arith.constant 0 : index
    %c0_15 = arith.constant 0 : index
    %14 = vector.load %arg6[%c0_13, %c0_14, %c0_15] : memref<1x1x128xf32, #tpu.memory_space<vmem>>, vector<1x1x128xf32>
    %15 = vector.shape_cast %14 : vector<1x1x128xf32> to vector<1x128xf32>
    %16 = vector.broadcast %15 : vector<1x128xf32> to vector<8x128xf32>
    %17 = arith.addf %13, %16 : vector<8x128xf32>
    %c0_16 = arith.constant 0 : index
    %c0_17 = arith.constant 0 : index
    %c0_18 = arith.constant 0 : index
    %18 = vector.load %arg7[%c0_16, %c0_17, %c0_18] : memref<1x8x128xf32, #tpu.memory_space<vmem>>, vector<1x8x128xf32>
    %19 = vector.shape_cast %18 : vector<1x8x128xf32> to vector<8x128xf32>
    %20 = vector.shape_cast %17 : vector<8x128xf32> to vector<1x8x128xf32>
    tpu.vector_store %arg7[%c0_16, %c0_17, %c0_18], %20 {strides = array<i32>} : memref<1x8x128xf32, #tpu.memory_space<vmem>>, vector<1x8x128xf32>,
    return
  }
  func.func @transform_0(%arg0: i32, %arg1: i32) -> (i32, i32, i32) {
    %c0_i32 = arith.constant 0 : i32
    %c0_i32_0 = arith.constant 0 : i32
    return %arg0, %arg1, %c0_i32 : i32, i32, i32
  }
  func.func @transform_1(%arg0: i32, %arg1: i32) -> (i32, i32, i32) {
    %c0_i32 = arith.constant 0 : i32
    %c0_i32_0 = arith.constant 0 : i32
    %c0_i32_1 = arith.constant 0 : i32
    return %arg0, %c0_i32, %c0_i32_0 : i32, i32, i32
  }
  func.func @transform_2(%arg0: i32, %arg1: i32) -> (i32, i32, i32) {
    %c0_i32 = arith.constant 0 : i32
    %c0_i32_0 = arith.constant 0 : i32
    %c0_i32_1 = arith.constant 0 : i32
    return %arg0, %c0_i32, %c0_i32_0 : i32, i32, i32
  }
  func.func @transform_3(%arg0: i32, %arg1: i32) -> (i32, i32, i32) {
    %c0_i32 = arith.constant 0 : i32
    %c0_i32_0 = arith.constant 0 : i32
    %c0_i32_1 = arith.constant 0 : i32
    return %arg0, %c0_i32, %c0_i32_0 : i32, i32, i32
  }
  func.func @transform_4(%arg0: i32, %arg1: i32) -> (i32, i32, i32) {
    %c0_i32 = arith.constant 0 : i32
    %c0_i32_0 = arith.constant 0 : i32
    %c0_i32_1 = arith.constant 0 : i32
    return %arg0, %c0_i32, %c0_i32_0 : i32, i32, i32
  }
  func.func @transform_5(%arg0: i32, %arg1: i32) -> (i32, i32, i32) {
    %c0_i32 = arith.constant 0 : i32
    %c0_i32_0 = arith.constant 0 : i32
    return %arg0, %arg1, %c0_i32 : i32, i32, i32
  }
}

</mosaic_0001>

<llo_original>
// kernel: fused_experts_forward.1
$region0: #{fused_experts_forward.1}
  #allocation0 [shape = 'u32[]', space=smem, size = 0x4, offset = 0x4, fixed_abs, tag = 'smem constant byte address 0x4 - core index']
  #allocation1 [shape = 'u32[72,128]{1,0:T(1,128)}', space=vmem, size = 0x9000, scoped, tag = 'internal scratch']
  %s0 = inlined_call_operand.vmem [shape: f32[2,8,128], index: 0, kind: input, shape index: {}]
  %s1 = inlined_call_operand.vmem [shape: f32[2,128,128], index: 1, kind: input, shape index: {}]
  %s2 = inlined_call_operand.vmem [shape: f32[2,1,128], index: 2, kind: input, shape index: {}]
  %s3 = inlined_call_operand.vmem [shape: f32[2,128,128], index: 3, kind: input, shape index: {}]
  %s4 = inlined_call_operand.vmem [shape: f32[2,1,128], index: 4, kind: input, shape index: {}]
  %s5 = inlined_call_operand.hbm [shape: f32[2,8,128], index: 5, kind: output, shape index: {}]
  %s6 = sld [smem:[#allocation0]]
  $region53: #{fused_experts_forward.1} parent=0
    _
  %s8 = ssub.s32 1, %s6
  %s9 = scalar_select 0, %s8, %s6
  $region1: #{fused_experts_forward.1} parent=0
    #allocation2 [shape = 'u8[8192]{0}', space=vmem, size = 0x2000, scoped, tag = 'output window, operand 0']
    #allocation3 [shape = 's32[2]{0}', space=sflag, size = 0x8, scoped, tag = 'scoped memory for fused_experts_forward.1']
    %10 = vsyncpa [#allocation3], 0
    %s11 = scalar_lea.sflag [#allocation3], 1
    %12 = vsyncpa %s11, 0
    loop: start=0, step=1, limit=4
    $region2: #{fused_experts_forward.1} parent=1 // loop_pre_header
      _
    $region3: #{fused_experts_forward.1} parent=1 // loop_header
      %s14 = sphi 0, %s18
      %p15 = scmp.ge.s32.totalorder %s14, 4
      %s21 = sphi 0, %s33
      %s22 = sphi 0, %s29
      %s23 = sphi 0, %s21
      %s24 = sphi 0, %s22
      %s25 = sphi 0, %s23
      %s26 = sphi 0, %s24
      %s38 = sphi 0, %s40
      %s41 = sphi 0, %s38
      %s42 = sphi 0, %s41
      %s58 = sphi 0, %s42
      %s64 = sphi 0, %s66
      %s67 = sphi 0, %s64
      %s68 = sphi 0, %s67
      %s84 = sphi 0, %s68
      %s90 = sphi 0, %s92
      %s93 = sphi 0, %s90
      %s94 = sphi 0, %s93
      %s110 = sphi 0, %s94
      %s116 = sphi 0, %s118
      %s119 = sphi 0, %s116
      %s120 = sphi 0, %s119
      %s136 = sphi 0, %s120
      %s142 = sphi 0, %s144
      %s145 = sphi 0, %s142
      %s146 = sphi 0, %s145
      %s162 = sphi 0, %s146
      %s170 = sphi 0, %s172
      %s173 = sphi 0, %s170
      %s174 = sphi 0, %s173
      %s190 = sphi 0, %s174
    $region4: #{fused_experts_forward.1} parent=1 // loop_header_branch
      %17 = sbr.rel (%p15) target = $region8
    $region5: #{fused_experts_forward.1} parent=1 // loop_body
      %s19 = ssub.s32 %s14, 1
      %s20 = ssub.s32 %s14, 2
      %s27 = sadd.s32 1, %s22
      %p28 = scmp.ge.s32.totalorder %s27, 1
      %s29 = scalar_select %p28, 0, %s27
      %s30 = sadd.s32 1, %s21
      %s31 = scalar_select %p28, %s30, %s21
      %p32 = scmp.ge.s32.totalorder %s31, 2
      %s33 = scalar_select %p32, 0, %s31
      %s34 = ssub.s32 %s21, %s33
      %s35 = ssub.s32 %s22, %s29
      %s36 = sor.u32 %s34, %s35
      %p37 = scmp.eq.s32.totalorder %s36, 0
      %s39 = sadd.s32 %s38, 1
      %s40 = scalar_select %p37, %s38, %s39
      %p43 = pneg %p37
      %p44 = scmp.eq.s32.totalorder %s14, 1
      %p45 = por %p43, %p44
      %p46 = scmp.ne.s32.totalorder %s38, %s41
      %p47 = scmp.eq.s32.totalorder %s14, 0
      %p48 = por %p46, %p47
      %p49 = scmp.ne.s32.totalorder %s38, %s41
      %p50 = scmp.eq.s32.totalorder %s19, 1
      %p51 = por %p49, %p50
      %p52 = scmp.ne.s32.totalorder %s41, %s42
      %p53 = scmp.eq.s32.totalorder %s19, 0
      %p54 = por %p52, %p53
      %p55 = scmp.ne.s32.totalorder %s41, %s42
      %p56 = scmp.eq.s32.totalorder %s20, 1
      %p57 = por %p55, %p56
      %p59 = scmp.ne.s32.totalorder %s42, %s58
      %p60 = scmp.eq.s32.totalorder %s20, 0
      %p61 = por %p59, %p60
      %s62 = ssub.s32 %s21, %s33
      %p63 = scmp.eq.s32.totalorder %s62, 0
      %s65 = sadd.s32 %s64, 1
      %s66 = scalar_select %p63, %s64, %s65
      %p69 = pneg %p63
      %p70 = scmp.eq.s32.totalorder %s14, 1
      %p71 = por %p69, %p70
      %p72 = scmp.ne.s32.totalorder %s64, %s67
      %p73 = scmp.eq.s32.totalorder %s14, 0
      %p74 = por %p72, %p73
      %p75 = scmp.ne.s32.totalorder %s64, %s67
      %p76 = scmp.eq.s32.totalorder %s19, 1
      %p77 = por %p75, %p76
      %p78 = scmp.ne.s32.totalorder %s67, %s68
      %p79 = scmp.eq.s32.totalorder %s19, 0
      %p80 = por %p78, %p79
      %p81 = scmp.ne.s32.totalorder %s67, %s68
      %p82 = scmp.eq.s32.totalorder %s20, 1
      %p83 = por %p81, %p82
      %p85 = scmp.ne.s32.totalorder %s68, %s84
      %p86 = scmp.eq.s32.totalorder %s20, 0
      %p87 = por %p85, %p86
      %s88 = ssub.s32 %s21, %s33
      %p89 = scmp.eq.s32.totalorder %s88, 0
      %s91 = sadd.s32 %s90, 1
      %s92 = scalar_select %p89, %s90, %s91
      %p95 = pneg %p89
      %p96 = scmp.eq.s32.totalorder %s14, 1
      %p97 = por %p95, %p96
      %p98 = scmp.ne.s32.totalorder %s90, %s93
      %p99 = scmp.eq.s32.totalorder %s14, 0
      %p100 = por %p98, %p99
      %p101 = scmp.ne.s32.totalorder %s90, %s93
      %p102 = scmp.eq.s32.totalorder %s19, 1
      %p103 = por %p101, %p102
      %p104 = scmp.ne.s32.totalorder %s93, %s94
      %p105 = scmp.eq.s32.totalorder %s19, 0
      %p106 = por %p104, %p105
      %p107 = scmp.ne.s32.totalorder %s93, %s94
      %p108 = scmp.eq.s32.totalorder %s20, 1
      %p109 = por %p107, %p108
      %p111 = scmp.ne.s32.totalorder %s94, %s110
      %p112 = scmp.eq.s32.totalorder %s20, 0
      %p113 = por %p111, %p112
      %s114 = ssub.s32 %s21, %s33
      %p115 = scmp.eq.s32.totalorder %s114, 0
      %s117 = sadd.s32 %s116, 1
      %s118 = scalar_select %p115, %s116, %s117
      %p121 = pneg %p115
      %p122 = scmp.eq.s32.totalorder %s14, 1
      %p123 = por %p121, %p122
      %p124 = scmp.ne.s32.totalorder %s116, %s119
      %p125 = scmp.eq.s32.totalorder %s14, 0
      %p126 = por %p124, %p125
      %p127 = scmp.ne.s32.totalorder %s116, %s119
      %p128 = scmp.eq.s32.totalorder %s19, 1
      %p129 = por %p127, %p128
      %p130 = scmp.ne.s32.totalorder %s119, %s120
      %p131 = scmp.eq.s32.totalorder %s19, 0
      %p132 = por %p130, %p131
      %p133 = scmp.ne.s32.totalorder %s119, %s120
      %p134 = scmp.eq.s32.totalorder %s20, 1
      %p135 = por %p133, %p134
      %p137 = scmp.ne.s32.totalorder %s120, %s136
      %p138 = scmp.eq.s32.totalorder %s20, 0
      %p139 = por %p137, %p138
      %s140 = ssub.s32 %s21, %s33
      %p141 = scmp.eq.s32.totalorder %s140, 0
      %s143 = sadd.s32 %s142, 1
      %s144 = scalar_select %p141, %s142, %s143
      %p147 = pneg %p141
      %p148 = scmp.eq.s32.totalorder %s14, 1
      %p149 = por %p147, %p148
      %p150 = scmp.ne.s32.totalorder %s142, %s145
      %p151 = scmp.eq.s32.totalorder %s14, 0
      %p152 = por %p150, %p151
      %p153 = scmp.ne.s32.totalorder %s142, %s145
      %p154 = scmp.eq.s32.totalorder %s19, 1
      %p155 = por %p153, %p154
      %p156 = scmp.ne.s32.totalorder %s145, %s146
      %p157 = scmp.eq.s32.totalorder %s19, 0
      %p158 = por %p156, %p157
      %p159 = scmp.ne.s32.totalorder %s145, %s146
      %p160 = scmp.eq.s32.totalorder %s20, 1
      %p161 = por %p159, %p160
      %p163 = scmp.ne.s32.totalorder %s146, %s162
      %p164 = scmp.eq.s32.totalorder %s20, 0
      %p165 = por %p163, %p164
      %s166 = ssub.s32 %s21, %s33
      %s167 = ssub.s32 %s22, %s29
      %s168 = sor.u32 %s166, %s167
      %p169 = scmp.eq.s32.totalorder %s168, 0
      %s171 = sadd.s32 %s170, 1
      %s172 = scalar_select %p169, %s170, %s171
      %p175 = pneg %p169
      %p176 = scmp.eq.s32.totalorder %s14, 1
      %p177 = por %p175, %p176
      %p178 = scmp.ne.s32.totalorder %s170, %s173
      %p179 = scmp.eq.s32.totalorder %s14, 0
      %p180 = por %p178, %p179
      %p181 = scmp.ne.s32.totalorder %s170, %s173
      %p182 = scmp.eq.s32.totalorder %s19, 1
      %p183 = por %p181, %p182
      %p184 = scmp.ne.s32.totalorder %s173, %s174
      %p185 = scmp.eq.s32.totalorder %s19, 0
      %p186 = por %p184, %p185
      %p187 = scmp.ne.s32.totalorder %s173, %s174
      %p188 = scmp.eq.s32.totalorder %s20, 1
      %p189 = por %p187, %p188
      %p191 = scmp.ne.s32.totalorder %s174, %s190
      %p192 = scmp.eq.s32.totalorder %s20, 0
      %p193 = por %p191, %p192
      %p194 = scmp.le.s32.totalorder 1, %s14
      %p195 = scmp.lt.s32.totalorder %s14, 3
      %p196 = pnand %p194, %p195
      %p197 = pneg %p196
      // Predicated region
      $region9: #{fused_experts_forward.1} parent=5 // pred_check
        _
      $region10: #{fused_experts_forward.1} parent=5 // pred_check_branch
        %199 = sbr.rel (%p196) target = $region12
      $region11: #{fused_experts_forward.1} parent=5 // pred_region
        %s200 = ssub.s32 %s14, 1
      $region12: #{fused_experts_forward.1} parent=5 // pred_fallthru
        _
      %p201 = scmp.lt.s32.totalorder %s14, 2
      // Predicated region
      $region13: #{fused_experts_forward.1} parent=5 // pred_check
        %p202 = pneg %p201
      $region14: #{fused_experts_forward.1} parent=5 // pred_check_branch
        %204 = sbr.rel (%p202) target = $region16
      $region15: #{fused_experts_forward.1} parent=5 // pred_region
        // Predicated region
        $region17: #{fused_experts_forward.1} parent=15 // pred_check
          %p205 = pneg %p48
        $region18: #{fused_experts_forward.1} parent=15 // pred_check_branch
          %207 = sbr.rel (%p205) target = $region20
        $region19: #{fused_experts_forward.1} parent=15 // pred_region
          %p208 = scmp.lt.s32.totalorder %s21, 1
          %s209 = scalar_select %p208, %s21, 1
          %p210 = scmp.lt.s32.totalorder %s22, 0
          %s211 = scalar_select %p210, %s22, 0
          %s212 = sadd.s32 %s211, %s209
          %s213 = smul.addr %s212, 8
          %s214 = scalar_lea.vmem %s0, %s213
        $region20: #{fused_experts_forward.1} parent=15 // pred_fallthru
          _
        // Predicated region
        $region21: #{fused_experts_forward.1} parent=15 // pred_check
          %p215 = pneg %p74
        $region22: #{fused_experts_forward.1} parent=15 // pred_check_branch
          %217 = sbr.rel (%p215) target = $region24
        $region23: #{fused_experts_forward.1} parent=15 // pred_region
          %p218 = scmp.lt.s32.totalorder %s21, 1
          %s219 = scalar_select %p218, %s21, 1
          %s220 = smul.addr %s219, 16
          %s221 = smul.addr %s220, 8
          %s222 = scalar_lea.vmem %s1, %s221
        $region24: #{fused_experts_forward.1} parent=15 // pred_fallthru
          _
        // Predicated region
        $region25: #{fused_experts_forward.1} parent=15 // pred_check
          %p223 = pneg %p100
        $region26: #{fused_experts_forward.1} parent=15 // pred_check_branch
          %225 = sbr.rel (%p223) target = $region28
        $region27: #{fused_experts_forward.1} parent=15 // pred_region
          %p226 = scmp.lt.s32.totalorder %s21, 1
          %s227 = scalar_select %p226, %s21, 1
          %s228 = scalar_lea.vmem %s2, %s227
        $region28: #{fused_experts_forward.1} parent=15 // pred_fallthru
          _
        // Predicated region
        $region29: #{fused_experts_forward.1} parent=15 // pred_check
          %p229 = pneg %p126
        $region30: #{fused_experts_forward.1} parent=15 // pred_check_branch
          %231 = sbr.rel (%p229) target = $region32
        $region31: #{fused_experts_forward.1} parent=15 // pred_region
          %p232 = scmp.lt.s32.totalorder %s21, 1
          %s233 = scalar_select %p232, %s21, 1
          %s234 = smul.addr %s233, 16
          %s235 = smul.addr %s234, 8
          %s236 = scalar_lea.vmem %s3, %s235
        $region32: #{fused_experts_forward.1} parent=15 // pred_fallthru
          _
        // Predicated region
        $region33: #{fused_experts_forward.1} parent=15 // pred_check
          %p237 = pneg %p152
        $region34: #{fused_experts_forward.1} parent=15 // pred_check_branch
          %239 = sbr.rel (%p237) target = $region36
        $region35: #{fused_experts_forward.1} parent=15 // pred_region
          %p240 = scmp.lt.s32.totalorder %s21, 1
          %s241 = scalar_select %p240, %s21, 1
          %s242 = scalar_lea.vmem %s4, %s241
        $region36: #{fused_experts_forward.1} parent=15 // pred_fallthru
          _
      $region16: #{fused_experts_forward.1} parent=5 // pred_fallthru
        _
      %p243 = scmp.le.s32.totalorder 1, %s14
      %p244 = scmp.lt.s32.totalorder %s14, 3
      %p245 = pnand %p243, %p244
      %p246 = pneg %p245
      // Predicated region
      $region37: #{fused_experts_forward.1} parent=5 // pred_check
        _
      $region38: #{fused_experts_forward.1} parent=5 // pred_check_branch
        %248 = sbr.rel (%p245) target = $region40
      $region39: #{fused_experts_forward.1} parent=5 // pred_region
        %s249 = ssub.s32 %s14, 1
        %p250 = scmp.lt.s32.totalorder %s23, 1
        %s251 = scalar_select %p250, %s23, 1
        %p252 = scmp.lt.s32.totalorder %s24, 0
        %s253 = scalar_select %p252, %s24, 0
        %s254 = sadd.s32 %s253, %s251
        %s255 = smul.addr %s254, 8
        %s256 = scalar_lea.vmem %s0, %s255
        %p257 = pneg %p54
        %p258 = pneg %p51
        %p259 = scmp.lt.s32.totalorder %s23, 1
        %s260 = scalar_select %p259, %s23, 1
        %s261 = smul.addr %s260, 16
        %s262 = smul.addr %s261, 8
        %s263 = scalar_lea.vmem %s1, %s262
        %p264 = pneg %p80
        %p265 = pneg %p77
        %p266 = scmp.lt.s32.totalorder %s23, 1
        %s267 = scalar_select %p266, %s23, 1
        %s268 = scalar_lea.vmem %s2, %s267
        %p269 = pneg %p106
        %p270 = pneg %p103
        %p271 = scmp.lt.s32.totalorder %s23, 1
        %s272 = scalar_select %p271, %s23, 1
        %s273 = smul.addr %s272, 16
        %s274 = smul.addr %s273, 8
        %s275 = scalar_lea.vmem %s3, %s274
        %p276 = pneg %p132
        %p277 = pneg %p129
        %p278 = scmp.lt.s32.totalorder %s23, 1
        %s279 = scalar_select %p278, %s23, 1
        %s280 = scalar_lea.vmem %s4, %s279
        %p281 = pneg %p158
        %p282 = pneg %p155
        %p283 = pneg %p186
        %p284 = pneg %p183
        %s285 = sand.u32 %s173, 1
        %s286 = scalar_lea.sflag [#allocation3], %s285
        %s287 = sand.u32 %s173, 1
        %s288 = smul.addr %s287, 8
        %s289 = scalar_lea.vmem [#allocation2], %s288
        %p290 = scmp.lt.s32.totalorder %s23, 1
        %s291 = scalar_select %p290, %s23, 1
        %p292 = scmp.lt.s32.totalorder %s24, 0
        %s293 = scalar_select %p292, %s24, 0
        %s294 = sadd.s32 %s293, %s291
        %s295 = smul.addr %s294, 8
        %s296 = scalar_lea.vmem %s0, %s295
        %p297 = scmp.lt.s32.totalorder %s23, 1
        %s298 = scalar_select %p297, %s23, 1
        %s299 = smul.addr %s298, 16
        %s300 = smul.addr %s299, 8
        %s301 = scalar_lea.vmem %s1, %s300
        %p302 = scmp.lt.s32.totalorder %s23, 1
        %s303 = scalar_select %p302, %s23, 1
        %s304 = scalar_lea.vmem %s2, %s303
        %p305 = scmp.lt.s32.totalorder %s23, 1
        %s306 = scalar_select %p305, %s23, 1
        %s307 = smul.addr %s306, 16
        %s308 = smul.addr %s307, 8
        %s309 = scalar_lea.vmem %s3, %s308
        %p310 = scmp.lt.s32.totalorder %s23, 1
        %s311 = scalar_select %p310, %s23, 1
        %s312 = scalar_lea.vmem %s4, %s311
        %v313 = vld [vmem:[%s296] sm:$0xff]
        %v314 = vld [vmem:[%s301] sm:$0xff]
        %v315 = vld [vmem:[%s301 + $0x8] sm:$0xff]
        %v316 = vld [vmem:[%s301 + $0x10] sm:$0xff]
        %v317 = vld [vmem:[%s301 + $0x18] sm:$0xff]
        %v318 = vld [vmem:[%s301 + $0x20] sm:$0xff]
        %v319 = vld [vmem:[%s301 + $0x28] sm:$0xff]
        %v320 = vld [vmem:[%s301 + $0x30] sm:$0xff]
        %v321 = vld [vmem:[%s301 + $0x38] sm:$0xff]
        %v322 = vld [vmem:[%s301 + $0x40] sm:$0xff]
        %v323 = vld [vmem:[%s301 + $0x48] sm:$0xff]
        %v324 = vld [vmem:[%s301 + $0x50] sm:$0xff]
        %v325 = vld [vmem:[%s301 + $0x58] sm:$0xff]
        %v326 = vld [vmem:[%s301 + $0x60] sm:$0xff]
        %v327 = vld [vmem:[%s301 + $0x68] sm:$0xff]
        %v328 = vld [vmem:[%s301 + $0x70] sm:$0xff]
        %v329 = vld [vmem:[%s301 + $0x78] sm:$0xff]
        %v330 = vld [vmem:[%s309] sm:$0xff]
        %v331 = vld [vmem:[%s309 + $0x8] sm:$0xff]
        %v332 = vld [vmem:[%s309 + $0x10] sm:$0xff]
        %v333 = vld [vmem:[%s309 + $0x18] sm:$0xff]
        %v334 = vld [vmem:[%s309 + $0x20] sm:$0xff]
        %v335 = vld [vmem:[%s309 + $0x28] sm:$0xff]
        %v336 = vld [vmem:[%s309 + $0x30] sm:$0xff]
        %v337 = vld [vmem:[%s309 + $0x38] sm:$0xff]
        %v338 = vld [vmem:[%s309 + $0x40] sm:$0xff]
        %v339 = vld [vmem:[%s309 + $0x48] sm:$0xff]
        %v340 = vld [vmem:[%s309 + $0x50] sm:$0xff]
        %v341 = vld [vmem:[%s309 + $0x58] sm:$0xff]
        %v342 = vld [vmem:[%s309 + $0x60] sm:$0xff]
        %v343 = vld [vmem:[%s309 + $0x68] sm:$0xff]
        %v344 = vld [vmem:[%s309 + $0x70] sm:$0xff]
        %v345 = vld [vmem:[%s309 + $0x78] sm:$0xff]
        %v346 = vld [vmem:[%s304] sm:$0x1]
        %v348 = vperm.slane %v346, 0
        %350 = vmatpush.msra.mxu0 %v329
        %351 = vmatpush.msra.mxu0 %v328
        %352 = vmatpush.msra.mxu0 %v327
        %353 = vmatpush.msra.mxu0 %v326
        %354 = vmatpush.msra.mxu0 %v325
        %355 = vmatpush.msra.mxu0 %v324
        %356 = vmatpush.msra.mxu0 %v323
        %357 = vmatpush.msra.mxu0 %v322
        %358 = vmatpush.msra.mxu0 %v321
        %359 = vmatpush.msra.mxu0 %v320
        %360 = vmatpush.msra.mxu0 %v319
        %361 = vmatpush.msra.mxu0 %v318
        %362 = vmatpush.msra.mxu0 %v317
        %363 = vmatpush.msra.mxu0 %v316
        %364 = vmatpush.msra.mxu0 %v315
        %365 = vmatpush.msra.mxu0 %v314
        %366 = vmatmul.f32.gmra.mxu0 %v313
        %v367 = vpop.f32.mrf.mxu0
        %v368 = vadd.f32 %v348, %v367
        %369 = vdwg.mxu0
        %v370 = vmax.f32 %v368, 0.0
        %v371 = vld [vmem:[%s312] sm:$0x1]
        %v373 = vperm.slane %v371, 0
        %375 = vmatpush.msra.mxu0 %v345
        %376 = vmatpush.msra.mxu0 %v344
        %377 = vmatpush.msra.mxu0 %v343
        %378 = vmatpush.msra.mxu0 %v342
        %379 = vmatpush.msra.mxu0 %v341
        %380 = vmatpush.msra.mxu0 %v340
        %381 = vmatpush.msra.mxu0 %v339
        %382 = vmatpush.msra.mxu0 %v338
        %383 = vmatpush.msra.mxu0 %v337
        %384 = vmatpush.msra.mxu0 %v336
        %385 = vmatpush.msra.mxu0 %v335
        %386 = vmatpush.msra.mxu0 %v334
        %387 = vmatpush.msra.mxu0 %v333
        %388 = vmatpush.msra.mxu0 %v332
        %389 = vmatpush.msra.mxu0 %v331
        %390 = vmatpush.msra.mxu0 %v330
        %391 = vmatmul.f32.gmra.mxu0 %v370
        %v392 = vpop.f32.mrf.mxu0
        %v393 = vadd.f32 %v373, %v392
        %394 = vdwg.mxu0
        %395 = vst [vmem:[%s289] sm:$0xff] %v393
        %s396 = sand.u32 %s173, 1
        %s397 = scalar_lea.sflag [#allocation3], %s396
        %s398 = sand.u32 %s173, 1
        %s399 = smul.addr %s398, 8
        %s400 = scalar_lea.vmem [#allocation2], %s399
        // Predicated region
        $region41: #{fused_experts_forward.1} parent=39 // pred_check
          %p401 = pneg %p183
        $region42: #{fused_experts_forward.1} parent=39 // pred_check_branch
          %403 = sbr.rel (%p401) target = $region44
        $region43: #{fused_experts_forward.1} parent=39 // pred_region
          %405 = vsyncadd %s397, 0
          %s406 = sadd.s32 %s24, %s23
          %s407 = smul.addr %s406, 8
          %s408 = scalar_lea.hbm %s5, %s407
          %s410 = sshll.u32 %s400, 4
          %s411 = int_to_ptr.vmem [resolvable:$true] %s410
          %s412 = sshll.u32 %s408, 4
          %s413 = int_to_ptr.hbm [resolvable:$true] %s412
          %415 = dma.vmem_to_hbm [thread:$0]  %s411, 128, %s413, %s397
        $region44: #{fused_experts_forward.1} parent=39 // pred_fallthru
          _
      $region40: #{fused_experts_forward.1} parent=5 // pred_fallthru
        _
      %p416 = scmp.le.s32.totalorder 2, %s14
      // Predicated region
      $region45: #{fused_experts_forward.1} parent=5 // pred_check
        %p417 = pneg %p416
      $region46: #{fused_experts_forward.1} parent=5 // pred_check_branch
        %419 = sbr.rel (%p417) target = $region48
      $region47: #{fused_experts_forward.1} parent=5 // pred_region
        %s420 = ssub.s32 %s14, 2
        // Predicated region
        $region49: #{fused_experts_forward.1} parent=47 // pred_check
          %p421 = pneg %p189
        $region50: #{fused_experts_forward.1} parent=47 // pred_check_branch
          %423 = sbr.rel (%p421) target = $region52
        $region51: #{fused_experts_forward.1} parent=47 // pred_region
          %s424 = sand.u32 %s174, 1
          %s425 = scalar_lea.sflag [#allocation3], %s424
          %s426 = sand.u32 %s174, 1
          %s427 = smul.addr %s426, 8
          %s428 = scalar_lea.vmem [#allocation2], %s427
          %430 = dma.done %s425, 128
        $region52: #{fused_experts_forward.1} parent=47 // pred_fallthru
          _
      $region48: #{fused_experts_forward.1} parent=5 // pred_fallthru
        _
    $region6: #{fused_experts_forward.1} parent=1 // loop_footer
      %s18 = sadd.s32 1, %s14
    $region7: #{fused_experts_forward.1} parent=1 // loop_footer_branch
      %13 = sbr.rel target = $region3
    $region8: #{fused_experts_forward.1} parent=1 // loop_exit
      _
    %431 = vsyncpa [#allocation3], 1
    %s432 = scalar_lea.sflag [#allocation3], 1
    %433 = vsyncpa %s432, 1

</llo_original>
